<compile_context>
chip_gen: v7x
topology: tpu7x:2x2x1
jax: 0.10.0
libtpu: 0.0.40
codegen_flags: <defaults>
</compile_context>

<pallas_src>
import functools

import jax
import jax.numpy as jnp
from jax.experimental import pallas as pl
from jax.experimental.pallas import tpu as pltpu

LN_EPS = 1e-5
LANE = 128      # vreg lane width: last dim must be a multiple of this to avoid masks
SUBLANE = 8     # vreg sublane width (f32)


def _round_up(n, m):
    return ((n + m - 1) // m) * m


def _mlp_block(h, w1, b1, w2, b2, gamma, beta, e_real, mm_dtype):
    """MLPBlock forward (eval): LayerNorm(Linear2(ReLU(Linear1(h))) + h).

    h is f32 (tile_b, E_pad); w1/w2 are mm_dtype (bf16 on the fast path);
    padded lanes of h / biases / gamma / beta are exactly zero.
    """
    m = jnp.dot(h.astype(mm_dtype), w1, preferred_element_type=jnp.float32) + b1
    m = jnp.maximum(m, 0.0)                                        # nn.ReLU
    o = jnp.dot(m.astype(mm_dtype), w2, preferred_element_type=jnp.float32) + b2
    r = o + h                                                      # residual
    # One-pass LayerNorm stats over the REAL embed dim (padded lanes contribute 0).
    inv_e = 1.0 / e_real
    s = jnp.sum(r, axis=-1, keepdims=True)
    s2 = jnp.sum(r * r, axis=-1, keepdims=True)
    mean = s * inv_e
    var = s2 * inv_e - mean * mean
    rhat = (r - mean) * jax.lax.rsqrt(var + LN_EPS)                # rsqrt -> EUP slot
    # gamma/beta are 0 on padded lanes => output padded lanes stay exactly 0.
    return rhat * gamma + beta


def mlp_embedder_kernel(x_ref,
                        we_w_ref, we_b_ref,
                        w1a_ref, b1a_ref, w2a_ref, b2a_ref, ga_ref, ba_ref,
                        w1b_ref, b1b_ref, w2b_ref, b2b_ref, gb_ref, bb_ref,
                        o_ref, *, e_real, mm_dtype):
    x = x_ref[...]
    # We: Linear(inp_dim -> embed_dim), f32 accumulation.
    h = jnp.dot(x.astype(mm_dtype), we_w_ref[...],
                preferred_element_type=jnp.float32) + we_b_ref[...]
    # encoder unit 0
    h = _mlp_block(h, w1a_ref[...], b1a_ref[...], w2a_ref[...], b2a_ref[...],
                   ga_ref[...], ba_ref[...], e_real, mm_dtype)
    # encoder unit 1
    h = _mlp_block(h, w1b_ref[...], b1b_ref[...], w2b_ref[...], b2b_ref[...],
                   gb_ref[...], bb_ref[...], e_real, mm_dtype)
    o_ref[...] = h.astype(o_ref.dtype)


def mlp_embedder(x, params, *, tile_b=512, use_bf16_matmul=True):
    """x: (B, inp_dim) f32. params: dict of weights (see init_params)."""
    B, inp = x.shape
    E = params["we_w"].shape[1]
    H = params["b0_w1"].shape[1]

    # Lane-dense padded feature dims (multiples of 128).
    inp_p = _round_up(inp, LANE)
    E_p = _round_up(E, LANE)
    H_p = _round_up(H, LANE)

    # Batch tiling: sublane-aligned, tile as large as requested (<= padded B).
    B_p = _round_up(B, SUBLANE)
    tile_b = max(SUBLANE, _round_up(min(tile_b, B_p), SUBLANE))
    B_p = _round_up(B_p, tile_b)
    grid_b = B_p // tile_b

    mm_dtype = jnp.bfloat16 if use_bf16_matmul else jnp.float32

    def pad2(a, rows, cols, dtype=jnp.float32):
        out = jnp.pad(a, ((0, rows - a.shape[0]), (0, cols - a.shape[1])))
        return out.astype(dtype)

    # Weights cast to the matmul dtype in the wrapper (halves DMA/VMEM on bf16 path);
    # biases / LayerNorm affine stay f32 (applied in f32 inside the kernel).
    args = (
        pad2(x, B_p, inp_p, mm_dtype),
        pad2(params["we_w"], inp_p, E_p, mm_dtype), pad2(params["we_b"], 1, E_p),
        pad2(params["b0_w1"], E_p, H_p, mm_dtype), pad2(params["b0_b1"], 1, H_p),
        pad2(params["b0_w2"], H_p, E_p, mm_dtype), pad2(params["b0_b2"], 1, E_p),
        pad2(params["b0_gamma"], 1, E_p), pad2(params["b0_beta"], 1, E_p),
        pad2(params["b1_w1"], E_p, H_p, mm_dtype), pad2(params["b1_b1"], 1, H_p),
        pad2(params["b1_w2"], H_p, E_p, mm_dtype), pad2(params["b1_b2"], 1, E_p),
        pad2(params["b1_gamma"], 1, E_p), pad2(params["b1_beta"], 1, E_p),
    )

    # Explicit per-operand specs (no closure-over-loop-variable lambdas).
    # x is blocked over the batch grid; every weight/bias uses a constant block
    # index so it is DMA'd once and stays VMEM-resident across batch tiles.
    in_specs = [pl.BlockSpec((tile_b, inp_p), lambda i: (i, 0))]
    for a in args[1:]:
        in_specs.append(pl.BlockSpec(a.shape, lambda i: (0, 0)))

    kernel = functools.partial(mlp_embedder_kernel,
                               e_real=float(E), mm_dtype=mm_dtype)

    out_p = pl.pallas_call(
        kernel,
        out_shape=jax.ShapeDtypeStruct((B_p, E_p), jnp.float32),
        grid=(grid_b,),
        in_specs=in_specs,
        out_specs=pl.BlockSpec((tile_b, E_p), lambda i: (i, 0)),
        compiler_params=pltpu.CompilerParams(
            # Batch axis is independent -> sharded across v7x's 2 TensorCores.
            dimension_semantics=("parallel",)),
    )(*args)
    # Strip batch / lane padding (cheap XLA slice).
    return out_p[:B, :E]


def init_params(key, inp_dim, embed_dim, mlp_embed_factor=2):
    """Deterministic synthetic parameters matching MLPEmbedder's __init__ shapes."""
    hid = embed_dim * mlp_embed_factor
    ks = jax.random.split(key, 10)

    def lin(k, fan_in, fan_out):
        kw, kb = jax.random.split(k)
        bound = 1.0 / jnp.sqrt(fan_in)
        w = jax.random.uniform(kw, (fan_in, fan_out), jnp.float32, -bound, bound)
        b = jax.random.uniform(kb, (1, fan_out), jnp.float32, -bound, bound)
        return w, b

    p = {}
    p["we_w"], p["we_b"] = lin(ks[0], inp_dim, embed_dim)
    # block 0
    p["b0_w1"], p["b0_b1"] = lin(ks[1], embed_dim, hid)
    p["b0_w2"], p["b0_b2"] = lin(ks[2], hid, embed_dim)
    p["b0_gamma"] = jnp.ones((1, embed_dim), jnp.float32)
    p["b0_beta"] = jnp.zeros((1, embed_dim), jnp.float32)
    # block 1
    p["b1_w1"], p["b1_b1"] = lin(ks[3], embed_dim, hid)
    p["b1_w2"], p["b1_b2"] = lin(ks[4], hid, embed_dim)
    p["b1_gamma"] = jnp.ones((1, embed_dim), jnp.float32)
    p["b1_beta"] = jnp.zeros((1, embed_dim), jnp.float32)
    return p


def mlp_embedder_ref(x, params):
    """Pure-JAX f32 reference for correctness checking."""
    h = x @ params["we_w"] + params["we_b"]

    def block(h, w1, b1, w2, b2, g, be):
        o = jnp.maximum(h @ w1 + b1, 0.0) @ w2 + b2
        r = o + h
        mean = r.mean(-1, keepdims=True)
        var = ((r - mean) ** 2).mean(-1, keepdims=True)
        return (r - mean) / jnp.sqrt(var + LN_EPS) * g + be

    h = block(h, params["b0_w1"], params["b0_b1"], params["b0_w2"],
              params["b0_b2"], params["b0_gamma"], params["b0_beta"])
    h = block(h, params["b1_w1"], params["b1_b1"], params["b1_w2"],
              params["b1_b2"], params["b1_gamma"], params["b1_beta"])
    return h


if __name__ == "__main__":
    B, INP_DIM, EMBED_DIM = 8, 16, 32

    key = jax.random.PRNGKey(0)
    kx, kp = jax.random.split(key)
    x = jax.random.normal(kx, (B, INP_DIM), jnp.float32)
    params = init_params(kp, INP_DIM, EMBED_DIM, mlp_embed_factor=2)

    ref = mlp_embedder_ref(x, params)

    # f32 MXU path: tight numerical check.
    out_f32 = jax.block_until_ready(mlp_embedder(x, params, use_bf16_matmul=False))
    assert out_f32.shape == (B, EMBED_DIM)
    assert jnp.allclose(out_f32, ref, atol=1e-4, rtol=1e-4), "f32 mismatch vs reference"

    # bf16 MXU path (default fast path on v6e/v7x): f32 accumulation, looser tolerance.
    out_bf16 = jax.block_until_ready(mlp_embedder(x, params, use_bf16_matmul=True))
    assert out_bf16.shape == (B, EMBED_DIM)
    assert jnp.allclose(out_bf16, ref, atol=5e-2, rtol=5e-2), "bf16 mismatch vs reference"

    print("KERNEL_OK")
</pallas_src>

<mosaic_0001>
module attributes {stable_mosaic.version = 11 : i64} {
  func.func @mlp_embedder_kernel(%arg0: i32, %arg1: memref<8x128xf32, #tpu.memory_space<vmem>>, %arg2: memref<128x128xf32, #tpu.memory_space<vmem>>, %arg3: memref<1x128xf32, #tpu.memory_space<vmem>>, %arg4: memref<128x128xf32, #tpu.memory_space<vmem>>, %arg5: memref<1x128xf32, #tpu.memory_space<vmem>>, %arg6: memref<128x128xf32, #tpu.memory_space<vmem>>, %arg7: memref<1x128xf32, #tpu.memory_space<vmem>>, %arg8: memref<1x128xf32, #tpu.memory_space<vmem>>, %arg9: memref<1x128xf32, #tpu.memory_space<vmem>>, %arg10: memref<128x128xf32, #tpu.memory_space<vmem>>, %arg11: memref<1x128xf32, #tpu.memory_space<vmem>>, %arg12: memref<128x128xf32, #tpu.memory_space<vmem>>, %arg13: memref<1x128xf32, #tpu.memory_space<vmem>>, %arg14: memref<1x128xf32, #tpu.memory_space<vmem>>, %arg15: memref<1x128xf32, #tpu.memory_space<vmem>>, %arg16: memref<8x128xf32, #tpu.memory_space<vmem>>) attributes {dimension_semantics = [#tpu.dimension_semantics<parallel>], iteration_bounds = array<i64: 1>, scalar_prefetch = 0 : i64, scratch_operands = 0 : i64, tpu.core_type = #tpu.core_type<tc>, window_params = [{transform_indices = @transform_0, window_bounds = array<i64: 8, 128>}, {pipeline_mode = #tpu.pipeline_mode<synchronous>, transform_indices = @transform_1, window_bounds = array<i64: 128, 128>}, {pipeline_mode = #tpu.pipeline_mode<synchronous>, transform_indices = @transform_2, window_bounds = array<i64: 1, 128>}, {pipeline_mode = #tpu.pipeline_mode<synchronous>, transform_indices = @transform_3, window_bounds = array<i64: 128, 128>}, {pipeline_mode = #tpu.pipeline_mode<synchronous>, transform_indices = @transform_4, window_bounds = array<i64: 1, 128>}, {pipeline_mode = #tpu.pipeline_mode<synchronous>, transform_indices = @transform_5, window_bounds = array<i64: 128, 128>}, {pipeline_mode = #tpu.pipeline_mode<synchronous>, transform_indices = @transform_6, window_bounds = array<i64: 1, 128>}, {pipeline_mode = #tpu.pipeline_mode<synchronous>, transform_indices = @transform_7, window_bounds = array<i64: 1, 128>}, {pipeline_mode = #tpu.pipeline_mode<synchronous>, transform_indices = @transform_8, window_bounds = array<i64: 1, 128>}, {pipeline_mode = #tpu.pipeline_mode<synchronous>, transform_indices = @transform_9, window_bounds = array<i64: 128, 128>}, {pipeline_mode = #tpu.pipeline_mode<synchronous>, transform_indices = @transform_10, window_bounds = array<i64: 1, 128>}, {pipeline_mode = #tpu.pipeline_mode<synchronous>, transform_indices = @transform_11, window_bounds = array<i64: 128, 128>}, {pipeline_mode = #tpu.pipeline_mode<synchronous>, transform_indices = @transform_12, window_bounds = array<i64: 1, 128>}, {pipeline_mode = #tpu.pipeline_mode<synchronous>, transform_indices = @transform_13, window_bounds = array<i64: 1, 128>}, {pipeline_mode = #tpu.pipeline_mode<synchronous>, transform_indices = @transform_14, window_bounds = array<i64: 1, 128>}, {transform_indices = @transform_15, window_bounds = array<i64: 8, 128>}]} {
    %c0 = arith.constant 0 : index
    %c0_0 = arith.constant 0 : index
    %0 = vector.load %arg1[%c0, %c0_0] : memref<8x128xf32, #tpu.memory_space<vmem>>, vector<8x128xf32>
    %c0_1 = arith.constant 0 : index
    %c0_2 = arith.constant 0 : index
    %1 = vector.load %arg2[%c0_1, %c0_2] : memref<128x128xf32, #tpu.memory_space<vmem>>, vector<128x128xf32>
    %cst = arith.constant dense<0.000000e+00> : vector<8x128xf32>
    %2 = tpu.matmul %0, %1, %cst {dimension_numbers = #tpu.dot_dimension_numbers<[1], [0], [0], [1], [0, 0, 1, 1], [], []>} : vector<8x128xf32>, vector<128x128xf32>, vector<8x128xf32> -> vector<8x128xf32>
    %c0_3 = arith.constant 0 : index
    %c0_4 = arith.constant 0 : index
    %3 = vector.load %arg3[%c0_3, %c0_4] : memref<1x128xf32, #tpu.memory_space<vmem>>, vector<1x128xf32>
    %4 = vector.broadcast %3 : vector<1x128xf32> to vector<8x128xf32>
    %5 = arith.addf %2, %4 : vector<8x128xf32>
    %c0_5 = arith.constant 0 : index
    %c0_6 = arith.constant 0 : index
    %6 = vector.load %arg4[%c0_5, %c0_6] : memref<128x128xf32, #tpu.memory_space<vmem>>, vector<128x128xf32>
    %c0_7 = arith.constant 0 : index
    %c0_8 = arith.constant 0 : index
    %7 = vector.load %arg5[%c0_7, %c0_8] : memref<1x128xf32, #tpu.memory_space<vmem>>, vector<1x128xf32>
    %c0_9 = arith.constant 0 : index
    %c0_10 = arith.constant 0 : index
    %8 = vector.load %arg6[%c0_9, %c0_10] : memref<128x128xf32, #tpu.memory_space<vmem>>, vector<128x128xf32>
    %c0_11 = arith.constant 0 : index
    %c0_12 = arith.constant 0 : index
    %9 = vector.load %arg7[%c0_11, %c0_12] : memref<1x128xf32, #tpu.memory_space<vmem>>, vector<1x128xf32>
    %c0_13 = arith.constant 0 : index
    %c0_14 = arith.constant 0 : index
    %10 = vector.load %arg8[%c0_13, %c0_14] : memref<1x128xf32, #tpu.memory_space<vmem>>, vector<1x128xf32>
    %c0_15 = arith.constant 0 : index
    %c0_16 = arith.constant 0 : index
    %11 = vector.load %arg9[%c0_15, %c0_16] : memref<1x128xf32, #tpu.memory_space<vmem>>, vector<1x128xf32>
    %cst_17 = arith.constant dense<0.000000e+00> : vector<8x128xf32>
    %12 = tpu.matmul %5, %6, %cst_17 {dimension_numbers = #tpu.dot_dimension_numbers<[1], [0], [0], [1], [0, 0, 1, 1], [], []>} : vector<8x128xf32>, vector<128x128xf32>, vector<8x128xf32> -> vector<8x128xf32>
    %13 = vector.broadcast %7 : vector<1x128xf32> to vector<8x128xf32>
    %14 = arith.addf %12, %13 : vector<8x128xf32>
    %cst_18 = arith.constant 0.000000e+00 : f32
    %15 = vector.broadcast %cst_18 : f32 to vector<8x128xf32>
    %16 = arith.maximumf %14, %15 : vector<8x128xf32>
    %cst_19 = arith.constant dense<0.000000e+00> : vector<8x128xf32>
    %17 = tpu.matmul %16, %8, %cst_19 {dimension_numbers = #tpu.dot_dimension_numbers<[1], [0], [0], [1], [0, 0, 1, 1], [], []>} : vector<8x128xf32>, vector<128x128xf32>, vector<8x128xf32> -> vector<8x128xf32>
    %18 = vector.broadcast %9 : vector<1x128xf32> to vector<8x128xf32>
    %19 = arith.addf %17, %18 : vector<8x128xf32>
    %20 = arith.addf %19, %5 : vector<8x128xf32>
    %cst_20 = arith.constant dense<0.000000e+00> : vector<8xf32>
    %21 = vector.multi_reduction <add>, %20, %cst_20 [1] : vector<8x128xf32> to vector<8xf32>
    %22 = vector.shape_cast %21 : vector<8xf32> to vector<8x1xf32>
    %23 = arith.mulf %20, %20 : vector<8x128xf32>
    %cst_21 = arith.constant dense<0.000000e+00> : vector<8xf32>
    %24 = vector.multi_reduction <add>, %23, %cst_21 [1] : vector<8x128xf32> to vector<8xf32>
    %25 = vector.shape_cast %24 : vector<8xf32> to vector<8x1xf32>
    %cst_22 = arith.constant 3.125000e-02 : f32
    %26 = vector.broadcast %cst_22 : f32 to vector<8x1xf32>
    %27 = arith.mulf %22, %26 : vector<8x1xf32>
    %cst_23 = arith.constant 3.125000e-02 : f32
    %28 = vector.broadcast %cst_23 : f32 to vector<8x1xf32>
    %29 = arith.mulf %25, %28 : vector<8x1xf32>
    %30 = arith.mulf %27, %27 : vector<8x1xf32>
    %31 = arith.subf %29, %30 : vector<8x1xf32>
    %32 = vector.broadcast %27 : vector<8x1xf32> to vector<8x128xf32>
    %33 = arith.subf %20, %32 : vector<8x128xf32>
    %cst_24 = arith.constant 9.99999974E-6 : f32
    %34 = vector.broadcast %cst_24 : f32 to vector<8x1xf32>
    %35 = arith.addf %31, %34 : vector<8x1xf32>
    %36 = math.rsqrt %35 : vector<8x1xf32>
    %37 = vector.broadcast %36 : vector<8x1xf32> to vector<8x128xf32>
    %38 = arith.mulf %33, %37 : vector<8x128xf32>
    %39 = vector.broadcast %10 : vector<1x128xf32> to vector<8x128xf32>
    %40 = arith.mulf %38, %39 : vector<8x128xf32>
    %41 = vector.broadcast %11 : vector<1x128xf32> to vector<8x128xf32>
    %42 = arith.addf %40, %41 : vector<8x128xf32>
    %c0_25 = arith.constant 0 : index
    %c0_26 = arith.constant 0 : index
    %43 = vector.load %arg10[%c0_25, %c0_26] : memref<128x128xf32, #tpu.memory_space<vmem>>, vector<128x128xf32>
    %c0_27 = arith.constant 0 : index
    %c0_28 = arith.constant 0 : index
    %44 = vector.load %arg11[%c0_27, %c0_28] : memref<1x128xf32, #tpu.memory_space<vmem>>, vector<1x128xf32>
    %c0_29 = arith.constant 0 : index
    %c0_30 = arith.constant 0 : index
    %45 = vector.load %arg12[%c0_29, %c0_30] : memref<128x128xf32, #tpu.memory_space<vmem>>, vector<128x128xf32>
    %c0_31 = arith.constant 0 : index
    %c0_32 = arith.constant 0 : index
    %46 = vector.load %arg13[%c0_31, %c0_32] : memref<1x128xf32, #tpu.memory_space<vmem>>, vector<1x128xf32>
    %c0_33 = arith.constant 0 : index
    %c0_34 = arith.constant 0 : index
    %47 = vector.load %arg14[%c0_33, %c0_34] : memref<1x128xf32, #tpu.memory_space<vmem>>, vector<1x128xf32>
    %c0_35 = arith.constant 0 : index
    %c0_36 = arith.constant 0 : index
    %48 = vector.load %arg15[%c0_35, %c0_36] : memref<1x128xf32, #tpu.memory_space<vmem>>, vector<1x128xf32>
    %cst_37 = arith.constant dense<0.000000e+00> : vector<8x128xf32>
    %49 = tpu.matmul %42, %43, %cst_37 {dimension_numbers = #tpu.dot_dimension_numbers<[1], [0], [0], [1], [0, 0, 1, 1], [], []>} : vector<8x128xf32>, vector<128x128xf32>, vector<8x128xf32> -> vector<8x128xf32>
    %50 = vector.broadcast %44 : vector<1x128xf32> to vector<8x128xf32>
    %51 = arith.addf %49, %50 : vector<8x128xf32>
    %cst_38 = arith.constant 0.000000e+00 : f32
    %52 = vector.broadcast %cst_38 : f32 to vector<8x128xf32>
    %53 = arith.maximumf %51, %52 : vector<8x128xf32>
    %cst_39 = arith.constant dense<0.000000e+00> : vector<8x128xf32>
    %54 = tpu.matmul %53, %45, %cst_39 {dimension_numbers = #tpu.dot_dimension_numbers<[1], [0], [0], [1], [0, 0, 1, 1], [], []>} : vector<8x128xf32>, vector<128x128xf32>, vector<8x128xf32> -> vector<8x128xf32>
    %55 = vector.broadcast %46 : vector<1x128xf32> to vector<8x128xf32>
    %56 = arith.addf %54, %55 : vector<8x128xf32>
    %57 = arith.addf %56, %42 : vector<8x128xf32>
    %cst_40 = arith.constant dense<0.000000e+00> : vector<8xf32>
    %58 = vector.multi_reduction <add>, %57, %cst_40 [1] : vector<8x128xf32> to vector<8xf32>
    %59 = vector.shape_cast %58 : vector<8xf32> to vector<8x1xf32>
    %60 = arith.mulf %57, %57 : vector<8x128xf32>
    %cst_41 = arith.constant dense<0.000000e+00> : vector<8xf32>
    %61 = vector.multi_reduction <add>, %60, %cst_41 [1] : vector<8x128xf32> to vector<8xf32>
    %62 = vector.shape_cast %61 : vector<8xf32> to vector<8x1xf32>
    %cst_42 = arith.constant 3.125000e-02 : f32
    %63 = vector.broadcast %cst_42 : f32 to vector<8x1xf32>
    %64 = arith.mulf %59, %63 : vector<8x1xf32>
    %cst_43 = arith.constant 3.125000e-02 : f32
    %65 = vector.broadcast %cst_43 : f32 to vector<8x1xf32>
    %66 = arith.mulf %62, %65 : vector<8x1xf32>
    %67 = arith.mulf %64, %64 : vector<8x1xf32>
    %68 = arith.subf %66, %67 : vector<8x1xf32>
    %69 = vector.broadcast %64 : vector<8x1xf32> to vector<8x128xf32>
    %70 = arith.subf %57, %69 : vector<8x128xf32>
    %cst_44 = arith.constant 9.99999974E-6 : f32
    %71 = vector.broadcast %cst_44 : f32 to vector<8x1xf32>
    %72 = arith.addf %68, %71 : vector<8x1xf32>
    %73 = math.rsqrt %72 : vector<8x1xf32>
    %74 = vector.broadcast %73 : vector<8x1xf32> to vector<8x128xf32>
    %75 = arith.mulf %70, %74 : vector<8x128xf32>
    %76 = vector.broadcast %47 : vector<1x128xf32> to vector<8x128xf32>
    %77 = arith.mulf %75, %76 : vector<8x128xf32>
    %78 = vector.broadcast %48 : vector<1x128xf32> to vector<8x128xf32>
    %79 = arith.addf %77, %78 : vector<8x128xf32>
    %c0_45 = arith.constant 0 : index
    %c0_46 = arith.constant 0 : index
    %80 = vector.load %arg16[%c0_45, %c0_46] : memref<8x128xf32, #tpu.memory_space<vmem>>, vector<8x128xf32>
    tpu.vector_store %arg16[%c0_45, %c0_46], %79 {strides = array<i32>} : memref<8x128xf32, #tpu.memory_space<vmem>>, vector<8x128xf32>,
    return
  }
  func.func @transform_0(%arg0: i32) -> (i32, i32) {
    %c0_i32 = arith.constant 0 : i32
    %c0_i32_0 = arith.constant 0 : i32
    return %arg0, %c0_i32 : i32, i32
  }
  func.func @transform_1(%arg0: i32) -> (i32, i32) {
    %c0_i32 = arith.constant 0 : i32
    %c0_i32_0 = arith.constant 0 : i32
    %c0_i32_1 = arith.constant 0 : i32
    return %c0_i32, %c0_i32_0 : i32, i32
  }
  func.func @transform_2(%arg0: i32) -> (i32, i32) {
    %c0_i32 = arith.constant 0 : i32
    %c0_i32_0 = arith.constant 0 : i32
    %c0_i32_1 = arith.constant 0 : i32
    return %c0_i32, %c0_i32_0 : i32, i32
  }
  func.func @transform_3(%arg0: i32) -> (i32, i32) {
    %c0_i32 = arith.constant 0 : i32
    %c0_i32_0 = arith.constant 0 : i32
    %c0_i32_1 = arith.constant 0 : i32
    return %c0_i32, %c0_i32_0 : i32, i32
  }
  func.func @transform_4(%arg0: i32) -> (i32, i32) {
    %c0_i32 = arith.constant 0 : i32
    %c0_i32_0 = arith.constant 0 : i32
    %c0_i32_1 = arith.constant 0 : i32
    return %c0_i32, %c0_i32_0 : i32, i32
  }
  func.func @transform_5(%arg0: i32) -> (i32, i32) {
    %c0_i32 = arith.constant 0 : i32
    %c0_i32_0 = arith.constant 0 : i32
    %c0_i32_1 = arith.constant 0 : i32
    return %c0_i32, %c0_i32_0 : i32, i32
  }
  func.func @transform_6(%arg0: i32) -> (i32, i32) {
    %c0_i32 = arith.constant 0 : i32
    %c0_i32_0 = arith.constant 0 : i32
    %c0_i32_1 = arith.constant 0 : i32
    return %c0_i32, %c0_i32_0 : i32, i32
  }
  func.func @transform_7(%arg0: i32) -> (i32, i32) {
    %c0_i32 = arith.constant 0 : i32
    %c0_i32_0 = arith.constant 0 : i32
    %c0_i32_1 = arith.constant 0 : i32
    return %c0_i32, %c0_i32_0 : i32, i32
  }
  func.func @transform_8(%arg0: i32) -> (i32, i32) {
    %c0_i32 = arith.constant 0 : i32
    %c0_i32_0 = arith.constant 0 : i32
    %c0_i32_1 = arith.constant 0 : i32
    return %c0_i32, %c0_i32_0 : i32, i32
  }
  func.func @transform_9(%arg0: i32) -> (i32, i32) {
    %c0_i32 = arith.constant 0 : i32
    %c0_i32_0 = arith.constant 0 : i32
    %c0_i32_1 = arith.constant 0 : i32
    return %c0_i32, %c0_i32_0 : i32, i32
  }
  func.func @transform_10(%arg0: i32) -> (i32, i32) {
    %c0_i32 = arith.constant 0 : i32
    %c0_i32_0 = arith.constant 0 : i32
    %c0_i32_1 = arith.constant 0 : i32
    return %c0_i32, %c0_i32_0 : i32, i32
  }
  func.func @transform_11(%arg0: i32) -> (i32, i32) {
    %c0_i32 = arith.constant 0 : i32
    %c0_i32_0 = arith.constant 0 : i32
    %c0_i32_1 = arith.constant 0 : i32
    return %c0_i32, %c0_i32_0 : i32, i32
  }
  func.func @transform_12(%arg0: i32) -> (i32, i32) {
    %c0_i32 = arith.constant 0 : i32
    %c0_i32_0 = arith.constant 0 : i32
    %c0_i32_1 = arith.constant 0 : i32
    return %c0_i32, %c0_i32_0 : i32, i32
  }
  func.func @transform_13(%arg0: i32) -> (i32, i32) {
    %c0_i32 = arith.constant 0 : i32
    %c0_i32_0 = arith.constant 0 : i32
    %c0_i32_1 = arith.constant 0 : i32
    return %c0_i32, %c0_i32_0 : i32, i32
  }
  func.func @transform_14(%arg0: i32) -> (i32, i32) {
    %c0_i32 = arith.constant 0 : i32
    %c0_i32_0 = arith.constant 0 : i32
    %c0_i32_1 = arith.constant 0 : i32
    return %c0_i32, %c0_i32_0 : i32, i32
  }
  func.func @transform_15(%arg0: i32) -> (i32, i32) {
    %c0_i32 = arith.constant 0 : i32
    %c0_i32_0 = arith.constant 0 : i32
    return %arg0, %c0_i32 : i32, i32
  }
}

</mosaic_0001>

<llo_original>
// kernel: tpu_custom_call.1
$region0: #{tpu_custom_call.1}
  #allocation0 [shape = 'u32[]', space=smem, size = 0x4, offset = 0x4, fixed_abs, tag = 'smem constant byte address 0x4 - core index']
  #allocation1 [shape = 'u32[144,128]{1,0:T(1,128)}', space=vmem, size = 0x12000, scoped, tag = 'internal scratch']
  %s0 = inlined_call_operand.hbm [shape: f32[8,128], index: 0, kind: input, shape index: {}]
  %s1 = inlined_call_operand.hbm [shape: f32[128,128], index: 1, kind: input, shape index: {}]
  %s2 = inlined_call_operand.vmem [shape: f32[1,128], index: 2, kind: input, shape index: {}]
  %s3 = inlined_call_operand.hbm [shape: f32[128,128], index: 3, kind: input, shape index: {}]
  %s4 = inlined_call_operand.vmem [shape: f32[1,128], index: 4, kind: input, shape index: {}]
  %s5 = inlined_call_operand.hbm [shape: f32[128,128], index: 5, kind: input, shape index: {}]
  %s6 = inlined_call_operand.vmem [shape: f32[1,128], index: 6, kind: input, shape index: {}]
  %s7 = inlined_call_operand.vmem [shape: f32[1,128], index: 7, kind: input, shape index: {}]
  %s8 = inlined_call_operand.vmem [shape: f32[1,128], index: 8, kind: input, shape index: {}]
  %s9 = inlined_call_operand.hbm [shape: f32[128,128], index: 9, kind: input, shape index: {}]
  %s10 = inlined_call_operand.vmem [shape: f32[1,128], index: 10, kind: input, shape index: {}]
  %s11 = inlined_call_operand.hbm [shape: f32[128,128], index: 11, kind: input, shape index: {}]
  %s12 = inlined_call_operand.vmem [shape: f32[1,128], index: 12, kind: input, shape index: {}]
  %s13 = inlined_call_operand.vmem [shape: f32[1,128], index: 13, kind: input, shape index: {}]
  %s14 = inlined_call_operand.vmem [shape: f32[1,128], index: 14, kind: input, shape index: {}]
  %s15 = inlined_call_operand.hbm [shape: f32[8,128], index: 15, kind: output, shape index: {}]
  %s16 = sld [smem:[#allocation0]]
  $region94: #{tpu_custom_call.1} parent=0
    _
  %s18 = ssub.s32 1, %s16
  %s19 = scalar_select 0, %s18, %s16
  $region1: #{tpu_custom_call.1} parent=0
    #allocation2 [shape = 'u8[4096]{0}', space=vmem, size = 0x1000, scoped, tag = 'input window, operand 0, single buffered']
    #allocation3 [shape = 's32[1]{0}', space=sflag, size = 0x4, scoped, tag = 'scoped memory for tpu_custom_call.1']
    #allocation4 [shape = 's32[1]{0}', space=sflag, size = 0x4, scoped, tag = 'scoped memory for tpu_custom_call.1']
    #allocation5 [shape = 'u8[65536]{0}', space=vmem, size = 0x10000, scoped, tag = 'input window, operand 1, single buffered']
    #allocation6 [shape = 's32[1]{0}', space=sflag, size = 0x4, scoped, tag = 'scoped memory for tpu_custom_call.1']
    #allocation7 [shape = 'u8[65536]{0}', space=vmem, size = 0x10000, scoped, tag = 'input window, operand 3, single buffered']
    #allocation8 [shape = 'u8[65536]{0}', space=vmem, size = 0x10000, scoped, tag = 'input window, operand 5, single buffered']
    #allocation9 [shape = 's32[1]{0}', space=sflag, size = 0x4, scoped, tag = 'scoped memory for tpu_custom_call.1']
    #allocation10 [shape = 'u8[65536]{0}', space=vmem, size = 0x10000, scoped, tag = 'input window, operand 9, single buffered']
    #allocation11 [shape = 'u8[65536]{0}', space=vmem, size = 0x10000, scoped, tag = 'input window, operand 11, single buffered']
    #allocation12 [shape = 's32[1]{0}', space=sflag, size = 0x4, scoped, tag = 'scoped memory for tpu_custom_call.1']
    #allocation13 [shape = 'u8[4096]{0}', space=vmem, size = 0x1000, scoped, tag = 'output window, operand 0, single buffered']
    %20 = vsyncpa [#allocation3], 0
    %21 = vsyncpa [#allocation6], 0
    %22 = vsyncpa [#allocation9], 0
    %23 = vsyncpa [#allocation12], 0
    %24 = vsyncpa [#allocation4], 0
    // Predicated region
    $region2: #{tpu_custom_call.1} parent=1 // pred_check
      _
    $region3: #{tpu_custom_call.1} parent=1 // pred_check_branch
      %26 = sbr.rel (0) target = $region5
    $region4: #{tpu_custom_call.1} parent=1 // pred_region
      %s28 = ssub.s32 128, 128
      %29 = vsyncadd [#allocation3], %s28
      %s31 = sshll.u32 [#allocation2], 4
      %s32 = int_to_ptr.vmem [resolvable:$true] %s31
      %34 = dma.hbm_to_vmem [thread:$0]  %s0, 128, %s32, [#allocation3]
    $region5: #{tpu_custom_call.1} parent=1 // pred_fallthru
      _
    // Predicated region
    $region6: #{tpu_custom_call.1} parent=1 // pred_check
      _
    $region7: #{tpu_custom_call.1} parent=1 // pred_check_branch
      %36 = sbr.rel (0) target = $region9
    $region8: #{tpu_custom_call.1} parent=1 // pred_region
      %s38 = ssub.s32 2048, 2048
      %39 = vsyncadd [#allocation6], %s38
      %s40 = sshll.u32 [#allocation5], 4
      %s41 = int_to_ptr.vmem [resolvable:$true] %s40
      %46 = dma.hbm_to_vmem [thread:$0]  %s1, 2048, %s41, [#allocation6], 128, 128, 8
    $region9: #{tpu_custom_call.1} parent=1 // pred_fallthru
      _
    // Predicated region
    $region10: #{tpu_custom_call.1} parent=1 // pred_check
      _
    $region11: #{tpu_custom_call.1} parent=1 // pred_check_branch
      %48 = sbr.rel (0) target = $region13
    $region12: #{tpu_custom_call.1} parent=1 // pred_region
      _
    $region13: #{tpu_custom_call.1} parent=1 // pred_fallthru
      _
    // Predicated region
    $region14: #{tpu_custom_call.1} parent=1 // pred_check
      _
    $region15: #{tpu_custom_call.1} parent=1 // pred_check_branch
      %50 = sbr.rel (0) target = $region17
    $region16: #{tpu_custom_call.1} parent=1 // pred_region
      %s52 = ssub.s32 2048, 2048
      %53 = vsyncadd [#allocation6], %s52
      %s54 = sshll.u32 [#allocation7], 4
      %s55 = int_to_ptr.vmem [resolvable:$true] %s54
      %60 = dma.hbm_to_vmem [thread:$0]  %s3, 2048, %s55, [#allocation6], 128, 128, 8
    $region17: #{tpu_custom_call.1} parent=1 // pred_fallthru
      _
    // Predicated region
    $region18: #{tpu_custom_call.1} parent=1 // pred_check
      _
    $region19: #{tpu_custom_call.1} parent=1 // pred_check_branch
      %62 = sbr.rel (0) target = $region21
    $region20: #{tpu_custom_call.1} parent=1 // pred_region
      _
    $region21: #{tpu_custom_call.1} parent=1 // pred_fallthru
      _
    // Predicated region
    $region22: #{tpu_custom_call.1} parent=1 // pred_check
      _
    $region23: #{tpu_custom_call.1} parent=1 // pred_check_branch
      %64 = sbr.rel (0) target = $region25
    $region24: #{tpu_custom_call.1} parent=1 // pred_region
      %s66 = ssub.s32 2048, 2048
      %67 = vsyncadd [#allocation9], %s66
      %s68 = sshll.u32 [#allocation8], 4
      %s69 = int_to_ptr.vmem [resolvable:$true] %s68
      %74 = dma.hbm_to_vmem [thread:$0]  %s5, 2048, %s69, [#allocation9], 128, 128, 8
    $region25: #{tpu_custom_call.1} parent=1 // pred_fallthru
      _
    // Predicated region
    $region26: #{tpu_custom_call.1} parent=1 // pred_check
      _
    $region27: #{tpu_custom_call.1} parent=1 // pred_check_branch
      %76 = sbr.rel (0) target = $region29
    $region28: #{tpu_custom_call.1} parent=1 // pred_region
      _
    $region29: #{tpu_custom_call.1} parent=1 // pred_fallthru
      _
    // Predicated region
    $region30: #{tpu_custom_call.1} parent=1 // pred_check
      _
    $region31: #{tpu_custom_call.1} parent=1 // pred_check_branch
      %78 = sbr.rel (0) target = $region33
    $region32: #{tpu_custom_call.1} parent=1 // pred_region
      _
    $region33: #{tpu_custom_call.1} parent=1 // pred_fallthru
      _
    // Predicated region
    $region34: #{tpu_custom_call.1} parent=1 // pred_check
      _
    $region35: #{tpu_custom_call.1} parent=1 // pred_check_branch
      %80 = sbr.rel (0) target = $region37
    $region36: #{tpu_custom_call.1} parent=1 // pred_region
      _
    $region37: #{tpu_custom_call.1} parent=1 // pred_fallthru
      _
    // Predicated region
    $region38: #{tpu_custom_call.1} parent=1 // pred_check
      _
    $region39: #{tpu_custom_call.1} parent=1 // pred_check_branch
      %82 = sbr.rel (0) target = $region41
    $region40: #{tpu_custom_call.1} parent=1 // pred_region
      %s84 = ssub.s32 2048, 2048
      %85 = vsyncadd [#allocation9], %s84
      %s86 = sshll.u32 [#allocation10], 4
      %s87 = int_to_ptr.vmem [resolvable:$true] %s86
      %92 = dma.hbm_to_vmem [thread:$0]  %s9, 2048, %s87, [#allocation9], 128, 128, 8
    $region41: #{tpu_custom_call.1} parent=1 // pred_fallthru
      _
    // Predicated region
    $region42: #{tpu_custom_call.1} parent=1 // pred_check
      _
    $region43: #{tpu_custom_call.1} parent=1 // pred_check_branch
      %94 = sbr.rel (0) target = $region45
    $region44: #{tpu_custom_call.1} parent=1 // pred_region
      _
    $region45: #{tpu_custom_call.1} parent=1 // pred_fallthru
      _
    // Predicated region
    $region46: #{tpu_custom_call.1} parent=1 // pred_check
      _
    $region47: #{tpu_custom_call.1} parent=1 // pred_check_branch
      %96 = sbr.rel (0) target = $region49
    $region48: #{tpu_custom_call.1} parent=1 // pred_region
      %s98 = ssub.s32 2048, 2048
      %99 = vsyncadd [#allocation12], %s98
      %s100 = sshll.u32 [#allocation11], 4
      %s101 = int_to_ptr.vmem [resolvable:$true] %s100
      %106 = dma.hbm_to_vmem [thread:$0]  %s11, 2048, %s101, [#allocation12], 128, 128, 8
    $region49: #{tpu_custom_call.1} parent=1 // pred_fallthru
      _
    // Predicated region
    $region50: #{tpu_custom_call.1} parent=1 // pred_check
      _
    $region51: #{tpu_custom_call.1} parent=1 // pred_check_branch
      %108 = sbr.rel (0) target = $region53
    $region52: #{tpu_custom_call.1} parent=1 // pred_region
      _
    $region53: #{tpu_custom_call.1} parent=1 // pred_fallthru
      _
    // Predicated region
    $region54: #{tpu_custom_call.1} parent=1 // pred_check
      _
    $region55: #{tpu_custom_call.1} parent=1 // pred_check_branch
      %110 = sbr.rel (0) target = $region57
    $region56: #{tpu_custom_call.1} parent=1 // pred_region
      _
    $region57: #{tpu_custom_call.1} parent=1 // pred_fallthru
      _
    // Predicated region
    $region58: #{tpu_custom_call.1} parent=1 // pred_check
      _
    $region59: #{tpu_custom_call.1} parent=1 // pred_check_branch
      %112 = sbr.rel (0) target = $region61
    $region60: #{tpu_custom_call.1} parent=1 // pred_region
      _
    $region61: #{tpu_custom_call.1} parent=1 // pred_fallthru
      _
    // Predicated region
    $region62: #{tpu_custom_call.1} parent=1 // pred_check
      _
    $region63: #{tpu_custom_call.1} parent=1 // pred_check_branch
      %114 = sbr.rel (0) target = $region65
    $region64: #{tpu_custom_call.1} parent=1 // pred_region
      %115 = dma.done [#allocation3], 128
    $region65: #{tpu_custom_call.1} parent=1 // pred_fallthru
      _
    // Predicated region
    $region66: #{tpu_custom_call.1} parent=1 // pred_check
      _
    $region67: #{tpu_custom_call.1} parent=1 // pred_check_branch
      %117 = sbr.rel (0) target = $region69
    $region68: #{tpu_custom_call.1} parent=1 // pred_region
      %118 = dma.done [#allocation6], 2048
    $region69: #{tpu_custom_call.1} parent=1 // pred_fallthru
      _
    // Predicated region
    $region70: #{tpu_custom_call.1} parent=1 // pred_check
      _
    $region71: #{tpu_custom_call.1} parent=1 // pred_check_branch
      %120 = sbr.rel (0) target = $region73
    $region72: #{tpu_custom_call.1} parent=1 // pred_region
      %121 = dma.done [#allocation6], 2048
    $region73: #{tpu_custom_call.1} parent=1 // pred_fallthru
      _
    // Predicated region
    $region74: #{tpu_custom_call.1} parent=1 // pred_check
      _
    $region75: #{tpu_custom_call.1} parent=1 // pred_check_branch
      %123 = sbr.rel (0) target = $region77
    $region76: #{tpu_custom_call.1} parent=1 // pred_region
      %124 = dma.done [#allocation9], 2048
    $region77: #{tpu_custom_call.1} parent=1 // pred_fallthru
      _
    // Predicated region
    $region78: #{tpu_custom_call.1} parent=1 // pred_check
      _
    $region79: #{tpu_custom_call.1} parent=1 // pred_check_branch
      %126 = sbr.rel (0) target = $region81
    $region80: #{tpu_custom_call.1} parent=1 // pred_region
      %127 = dma.done [#allocation9], 2048
    $region81: #{tpu_custom_call.1} parent=1 // pred_fallthru
      _
    // Predicated region
    $region82: #{tpu_custom_call.1} parent=1 // pred_check
      _
    $region83: #{tpu_custom_call.1} parent=1 // pred_check_branch
      %129 = sbr.rel (0) target = $region85
    $region84: #{tpu_custom_call.1} parent=1 // pred_region
      %130 = dma.done [#allocation12], 2048
    $region85: #{tpu_custom_call.1} parent=1 // pred_fallthru
      _
    %v131 = vld [vmem:[#allocation2] sm:$0xff]
    %v132 = vld [vmem:[#allocation5] sm:$0xff]
    %v133 = vld [vmem:[#allocation5 + $0x8] sm:$0xff]
    %v134 = vld [vmem:[#allocation5 + $0x10] sm:$0xff]
    %v135 = vld [vmem:[#allocation5 + $0x18] sm:$0xff]
    %v136 = vld [vmem:[#allocation5 + $0x20] sm:$0xff]
    %v137 = vld [vmem:[#allocation5 + $0x28] sm:$0xff]
    %v138 = vld [vmem:[#allocation5 + $0x30] sm:$0xff]
    %v139 = vld [vmem:[#allocation5 + $0x38] sm:$0xff]
    %v140 = vld [vmem:[#allocation5 + $0x40] sm:$0xff]
    %v141 = vld [vmem:[#allocation5 + $0x48] sm:$0xff]
    %v142 = vld [vmem:[#allocation5 + $0x50] sm:$0xff]
    %v143 = vld [vmem:[#allocation5 + $0x58] sm:$0xff]
    %v144 = vld [vmem:[#allocation5 + $0x60] sm:$0xff]
    %v145 = vld [vmem:[#allocation5 + $0x68] sm:$0xff]
    %v146 = vld [vmem:[#allocation5 + $0x70] sm:$0xff]
    %v147 = vld [vmem:[#allocation5 + $0x78] sm:$0xff]
    %v148 = vld [vmem:[%s2] sm:$0x1]
    %v150 = vlaneseq
    %v151 = vshrl.u32 %v150, 7
    %v152 = vsub.s32 0, %v151
    %v153 = vrot.slane %v148, %v152
    %155 = vmatprep.subr.mxu0 0.0
    %156 = vmatpush1.msra.mxu0 %v132
    %157 = vmatprep.subr.mxu0 0.0
    %158 = vmatpush1.msra.mxu0 %v133
    %159 = vmatprep.subr.mxu0 0.0
    %160 = vmatpush1.msra.mxu0 %v134
    %161 = vmatprep.subr.mxu0 0.0
    %162 = vmatpush1.msra.mxu0 %v135
    %163 = vmatprep.subr.mxu0 0.0
    %164 = vmatpush1.msra.mxu0 %v136
    %165 = vmatprep.subr.mxu0 0.0
    %166 = vmatpush1.msra.mxu0 %v137
    %167 = vmatprep.subr.mxu0 0.0
    %168 = vmatpush1.msra.mxu0 %v138
    %169 = vmatprep.subr.mxu0 0.0
    %170 = vmatpush1.msra.mxu0 %v139
    %171 = vmatprep.subr.mxu0 0.0
    %172 = vmatpush1.msra.mxu0 %v140
    %173 = vmatprep.subr.mxu0 0.0
    %174 = vmatpush1.msra.mxu0 %v141
    %175 = vmatprep.subr.mxu0 0.0
    %176 = vmatpush1.msra.mxu0 %v142
    %177 = vmatprep.subr.mxu0 0.0
    %178 = vmatpush1.msra.mxu0 %v143
    %179 = vmatprep.subr.mxu0 0.0
    %180 = vmatpush1.msra.mxu0 %v144
    %181 = vmatprep.subr.mxu0 0.0
    %182 = vmatpush1.msra.mxu0 %v145
    %183 = vmatprep.subr.mxu0 0.0
    %184 = vmatpush1.msra.mxu0 %v146
    %185 = vmatprep.subr.mxu0 0.0
    %186 = vmatpush1.msra.mxu0 %v147
    %187 = vmatprep.subr.mxu0 0.0
    %188 = vmatpush1.msra.mxu0 0.0
    %189 = vmatprep.subr.mxu0 0.0
    %190 = vmatpush1.msra.mxu0 0.0
    %191 = vmatprep.subr.mxu0 0.0
    %192 = vmatpush1.msra.mxu0 0.0
    %193 = vmatprep.subr.mxu0 0.0
    %194 = vmatpush1.msra.mxu0 0.0
    %195 = vmatprep.subr.mxu0 0.0
    %196 = vmatpush1.msra.mxu0 0.0
    %197 = vmatprep.subr.mxu0 0.0
    %198 = vmatpush1.msra.mxu0 0.0
    %199 = vmatprep.subr.mxu0 0.0
    %200 = vmatpush1.msra.mxu0 0.0
    %201 = vmatprep.subr.mxu0 0.0
    %202 = vmatpush1.msra.mxu0 0.0
    %203 = vmatprep.subr.mxu0 0.0
    %204 = vmatpush1.msra.mxu0 0.0
    %205 = vmatprep.subr.mxu0 0.0
    %206 = vmatpush1.msra.mxu0 0.0
    %207 = vmatprep.subr.mxu0 0.0
    %208 = vmatpush1.msra.mxu0 0.0
    %209 = vmatprep.subr.mxu0 0.0
    %210 = vmatpush1.msra.mxu0 0.0
    %211 = vmatprep.subr.mxu0 0.0
    %212 = vmatpush1.msra.mxu0 0.0
    %213 = vmatprep.subr.mxu0 0.0
    %214 = vmatpush1.msra.mxu0 0.0
    %215 = vmatprep.subr.mxu0 0.0
    %216 = vmatpush1.msra.mxu0 0.0
    %217 = vmatprep.subr.mxu0 0.0
    %218 = vmatpush1.msra.mxu0 0.0
    %219 = vmatprep.mubr.f32.mxu0 0.0
    %220 = vmatmul.mubr.f32.gmra.mrb[0].mxu0 %v131
    %v221 = vpop.f32.mrb[0].mxu0
    %v222 = vadd.f32 %v153, %v221
    %v223 = vpop.f32.mrb[0].mxu0
    %224 = vdwg.mxu0
    %v225 = vld [vmem:[#allocation7] sm:$0xff]
    %v226 = vld [vmem:[#allocation7 + $0x8] sm:$0xff]
    %v227 = vld [vmem:[#allocation7 + $0x10] sm:$0xff]
    %v228 = vld [vmem:[#allocation7 + $0x18] sm:$0xff]
    %v229 = vld [vmem:[#allocation7 + $0x20] sm:$0xff]
    %v230 = vld [vmem:[#allocation7 + $0x28] sm:$0xff]
    %v231 = vld [vmem:[#allocation7 + $0x30] sm:$0xff]
    %v232 = vld [vmem:[#allocation7 + $0x38] sm:$0xff]
    %v233 = vld [vmem:[#allocation7 + $0x40] sm:$0xff]
    %v234 = vld [vmem:[#allocation7 + $0x48] sm:$0xff]
    %v235 = vld [vmem:[#allocation7 + $0x50] sm:$0xff]
    %v236 = vld [vmem:[#allocation7 + $0x58] sm:$0xff]
    %v237 = vld [vmem:[#allocation7 + $0x60] sm:$0xff]
    %v238 = vld [vmem:[#allocation7 + $0x68] sm:$0xff]
    %v239 = vld [vmem:[#allocation7 + $0x70] sm:$0xff]
    %v240 = vld [vmem:[#allocation7 + $0x78] sm:$0xff]
    %v241 = vld [vmem:[%s4] sm:$0x1]
    %v242 = vld [vmem:[#allocation8] sm:$0xff]
    %v243 = vld [vmem:[#allocation8 + $0x8] sm:$0xff]
    %v244 = vld [vmem:[#allocation8 + $0x10] sm:$0xff]
    %v245 = vld [vmem:[#allocation8 + $0x18] sm:$0xff]
    %v246 = vld [vmem:[#allocation8 + $0x20] sm:$0xff]
    %v247 = vld [vmem:[#allocation8 + $0x28] sm:$0xff]
    %v248 = vld [vmem:[#allocation8 + $0x30] sm:$0xff]
    %v249 = vld [vmem:[#allocation8 + $0x38] sm:$0xff]
    %v250 = vld [vmem:[#allocation8 + $0x40] sm:$0xff]
    %v251 = vld [vmem:[#allocation8 + $0x48] sm:$0xff]
    %v252 = vld [vmem:[#allocation8 + $0x50] sm:$0xff]
    %v253 = vld [vmem:[#allocation8 + $0x58] sm:$0xff]
    %v254 = vld [vmem:[#allocation8 + $0x60] sm:$0xff]
    %v255 = vld [vmem:[#allocation8 + $0x68] sm:$0xff]
    %v256 = vld [vmem:[#allocation8 + $0x70] sm:$0xff]
    %v257 = vld [vmem:[#allocation8 + $0x78] sm:$0xff]
    %v258 = vld [vmem:[%s6] sm:$0x1]
    %v259 = vld [vmem:[%s7] sm:$0x1]
    %v260 = vld [vmem:[%s8] sm:$0x1]
    %v262 = vlaneseq
    %v263 = vshrl.u32 %v262, 7
    %v264 = vsub.s32 0, %v263
    %v265 = vrot.slane %v241, %v264
    %267 = vmatprep.subr.mxu0 0.0
    %268 = vmatpush1.msra.mxu0 %v225
    %269 = vmatprep.subr.mxu0 0.0
    %270 = vmatpush1.msra.mxu0 %v226
    %271 = vmatprep.subr.mxu0 0.0
    %272 = vmatpush1.msra.mxu0 %v227
    %273 = vmatprep.subr.mxu0 0.0
    %274 = vmatpush1.msra.mxu0 %v228
    %275 = vmatprep.subr.mxu0 0.0
    %276 = vmatpush1.msra.mxu0 %v229
    %277 = vmatprep.subr.mxu0 0.0
    %278 = vmatpush1.msra.mxu0 %v230
    %279 = vmatprep.subr.mxu0 0.0
    %280 = vmatpush1.msra.mxu0 %v231
    %281 = vmatprep.subr.mxu0 0.0
    %282 = vmatpush1.msra.mxu0 %v232
    %283 = vmatprep.subr.mxu0 0.0
    %284 = vmatpush1.msra.mxu0 %v233
    %285 = vmatprep.subr.mxu0 0.0
    %286 = vmatpush1.msra.mxu0 %v234
    %287 = vmatprep.subr.mxu0 0.0
    %288 = vmatpush1.msra.mxu0 %v235
    %289 = vmatprep.subr.mxu0 0.0
    %290 = vmatpush1.msra.mxu0 %v236
    %291 = vmatprep.subr.mxu0 0.0
    %292 = vmatpush1.msra.mxu0 %v237
    %293 = vmatprep.subr.mxu0 0.0
    %294 = vmatpush1.msra.mxu0 %v238
    %295 = vmatprep.subr.mxu0 0.0
    %296 = vmatpush1.msra.mxu0 %v239
    %297 = vmatprep.subr.mxu0 0.0
    %298 = vmatpush1.msra.mxu0 %v240
    %299 = vmatprep.subr.mxu0 0.0
    %300 = vmatpush1.msra.mxu0 0.0
    %301 = vmatprep.subr.mxu0 0.0
    %302 = vmatpush1.msra.mxu0 0.0
    %303 = vmatprep.subr.mxu0 0.0
    %304 = vmatpush1.msra.mxu0 0.0
    %305 = vmatprep.subr.mxu0 0.0
    %306 = vmatpush1.msra.mxu0 0.0
    %307 = vmatprep.subr.mxu0 0.0
    %308 = vmatpush1.msra.mxu0 0.0
    %309 = vmatprep.subr.mxu0 0.0
    %310 = vmatpush1.msra.mxu0 0.0
    %311 = vmatprep.subr.mxu0 0.0
    %312 = vmatpush1.msra.mxu0 0.0
    %313 = vmatprep.subr.mxu0 0.0
    %314 = vmatpush1.msra.mxu0 0.0
    %315 = vmatprep.subr.mxu0 0.0
    %316 = vmatpush1.msra.mxu0 0.0
    %317 = vmatprep.subr.mxu0 0.0
    %318 = vmatpush1.msra.mxu0 0.0
    %319 = vmatprep.subr.mxu0 0.0
    %320 = vmatpush1.msra.mxu0 0.0
    %321 = vmatprep.subr.mxu0 0.0
    %322 = vmatpush1.msra.mxu0 0.0
    %323 = vmatprep.subr.mxu0 0.0
    %324 = vmatpush1.msra.mxu0 0.0
    %325 = vmatprep.subr.mxu0 0.0
    %326 = vmatpush1.msra.mxu0 0.0
    %327 = vmatprep.subr.mxu0 0.0
    %328 = vmatpush1.msra.mxu0 0.0
    %329 = vmatprep.subr.mxu0 0.0
    %330 = vmatpush1.msra.mxu0 0.0
    %331 = vmatprep.mubr.f32.mxu0 0.0
    %332 = vmatmul.mubr.f32.gmra.mrb[0].mxu0 %v222
    %v333 = vpop.f32.mrb[0].mxu0
    %v334 = vadd.f32 %v265, %v333
    %v335 = vpop.f32.mrb[0].mxu0
    %336 = vdwg.mxu0
    %v337 = vmax.f32 %v334, 0.0
    %v339 = vlaneseq
    %v340 = vshrl.u32 %v339, 7
    %v341 = vsub.s32 0, %v340
    %v342 = vrot.slane %v258, %v341
    %344 = vmatprep.subr.mxu0 0.0
    %345 = vmatpush1.msra.mxu0 %v242
    %346 = vmatprep.subr.mxu0 0.0
    %347 = vmatpush1.msra.mxu0 %v243
    %348 = vmatprep.subr.mxu0 0.0
    %349 = vmatpush1.msra.mxu0 %v244
    %350 = vmatprep.subr.mxu0 0.0
    %351 = vmatpush1.msra.mxu0 %v245
    %352 = vmatprep.subr.mxu0 0.0
    %353 = vmatpush1.msra.mxu0 %v246
    %354 = vmatprep.subr.mxu0 0.0
    %355 = vmatpush1.msra.mxu0 %v247
    %356 = vmatprep.subr.mxu0 0.0
    %357 = vmatpush1.msra.mxu0 %v248
    %358 = vmatprep.subr.mxu0 0.0
    %359 = vmatpush1.msra.mxu0 %v249
    %360 = vmatprep.subr.mxu0 0.0
    %361 = vmatpush1.msra.mxu0 %v250
    %362 = vmatprep.subr.mxu0 0.0
    %363 = vmatpush1.msra.mxu0 %v251
    %364 = vmatprep.subr.mxu0 0.0
    %365 = vmatpush1.msra.mxu0 %v252
    %366 = vmatprep.subr.mxu0 0.0
    %367 = vmatpush1.msra.mxu0 %v253
    %368 = vmatprep.subr.mxu0 0.0
    %369 = vmatpush1.msra.mxu0 %v254
    %370 = vmatprep.subr.mxu0 0.0
    %371 = vmatpush1.msra.mxu0 %v255
    %372 = vmatprep.subr.mxu0 0.0
    %373 = vmatpush1.msra.mxu0 %v256
    %374 = vmatprep.subr.mxu0 0.0
    %375 = vmatpush1.msra.mxu0 %v257
    %376 = vmatprep.subr.mxu0 0.0
    %377 = vmatpush1.msra.mxu0 0.0
    %378 = vmatprep.subr.mxu0 0.0
    %379 = vmatpush1.msra.mxu0 0.0
    %380 = vmatprep.subr.mxu0 0.0
    %381 = vmatpush1.msra.mxu0 0.0
    %382 = vmatprep.subr.mxu0 0.0
    %383 = vmatpush1.msra.mxu0 0.0
    %384 = vmatprep.subr.mxu0 0.0
    %385 = vmatpush1.msra.mxu0 0.0
    %386 = vmatprep.subr.mxu0 0.0
    %387 = vmatpush1.msra.mxu0 0.0
    %388 = vmatprep.subr.mxu0 0.0
    %389 = vmatpush1.msra.mxu0 0.0
    %390 = vmatprep.subr.mxu0 0.0
    %391 = vmatpush1.msra.mxu0 0.0
    %392 = vmatprep.subr.mxu0 0.0
    %393 = vmatpush1.msra.mxu0 0.0
    %394 = vmatprep.subr.mxu0 0.0
    %395 = vmatpush1.msra.mxu0 0.0
    %396 = vmatprep.subr.mxu0 0.0
    %397 = vmatpush1.msra.mxu0 0.0
    %398 = vmatprep.subr.mxu0 0.0
    %399 = vmatpush1.msra.mxu0 0.0
    %400 = vmatprep.subr.mxu0 0.0
    %401 = vmatpush1.msra.mxu0 0.0
    %402 = vmatprep.subr.mxu0 0.0
    %403 = vmatpush1.msra.mxu0 0.0
    %404 = vmatprep.subr.mxu0 0.0
    %405 = vmatpush1.msra.mxu0 0.0
    %406 = vmatprep.subr.mxu0 0.0
    %407 = vmatpush1.msra.mxu0 0.0
    %408 = vmatprep.mubr.f32.mxu0 0.0
    %409 = vmatmul.mubr.f32.gmra.mrb[0].mxu0 %v337
    %v410 = vpop.f32.mrb[0].mxu0
    %v411 = vadd.f32 %v342, %v410
    %v412 = vpop.f32.mrb[0].mxu0
    %413 = vdwg.mxu0
    %v414 = vadd.f32 %v411, %v222
    %415 = vadd.xlane.f32.xlu0 %v414
    %v416 = vpop.xlane.xlu0 %415
    %v417 = vmul.f32 %v414, %v414
    %418 = vadd.xlane.f32.xlu0 %v417
    %v419 = vpop.xlane.xlu0 %418
    %v420 = vmul.f32 %v416, 0.03125
    %v421 = vmul.f32 %v419, 0.03125
    %v422 = vmul.f32 %v420, %v420
    %v423 = vsub.f32 %v421, %v422
    %v424 = vsub.f32 %v414, %v420
    %v425 = vadd.f32 %v423, 1e-05
    %v426 = vrsqrt.pop %v425
    %v427 = vmul.f32 %v424, %v426
    %v429 = vlaneseq
    %v430 = vshrl.u32 %v429, 7
    %v431 = vsub.s32 0, %v430
    %v432 = vrot.slane %v259, %v431
    %v434 = vmul.f32 %v427, %v432
    %v436 = vlaneseq
    %v437 = vshrl.u32 %v436, 7
    %v438 = vsub.s32 0, %v437
    %v439 = vrot.slane %v260, %v438
    %v441 = vadd.f32 %v434, %v439
    %v442 = vld [vmem:[#allocation10] sm:$0xff]
    %v443 = vld [vmem:[#allocation10 + $0x8] sm:$0xff]
    %v444 = vld [vmem:[#allocation10 + $0x10] sm:$0xff]
    %v445 = vld [vmem:[#allocation10 + $0x18] sm:$0xff]
    %v446 = vld [vmem:[#allocation10 + $0x20] sm:$0xff]
    %v447 = vld [vmem:[#allocation10 + $0x28] sm:$0xff]
    %v448 = vld [vmem:[#allocation10 + $0x30] sm:$0xff]
    %v449 = vld [vmem:[#allocation10 + $0x38] sm:$0xff]
    %v450 = vld [vmem:[#allocation10 + $0x40] sm:$0xff]
    %v451 = vld [vmem:[#allocation10 + $0x48] sm:$0xff]
    %v452 = vld [vmem:[#allocation10 + $0x50] sm:$0xff]
    %v453 = vld [vmem:[#allocation10 + $0x58] sm:$0xff]
    %v454 = vld [vmem:[#allocation10 + $0x60] sm:$0xff]
    %v455 = vld [vmem:[#allocation10 + $0x68] sm:$0xff]
    %v456 = vld [vmem:[#allocation10 + $0x70] sm:$0xff]
    %v457 = vld [vmem:[#allocation10 + $0x78] sm:$0xff]
    %v458 = vld [vmem:[%s10] sm:$0x1]
    %v459 = vld [vmem:[#allocation11] sm:$0xff]
    %v460 = vld [vmem:[#allocation11 + $0x8] sm:$0xff]
    %v461 = vld [vmem:[#allocation11 + $0x10] sm:$0xff]
    %v462 = vld [vmem:[#allocation11 + $0x18] sm:$0xff]
    %v463 = vld [vmem:[#allocation11 + $0x20] sm:$0xff]
    %v464 = vld [vmem:[#allocation11 + $0x28] sm:$0xff]
    %v465 = vld [vmem:[#allocation11 + $0x30] sm:$0xff]
    %v466 = vld [vmem:[#allocation11 + $0x38] sm:$0xff]
    %v467 = vld [vmem:[#allocation11 + $0x40] sm:$0xff]
    %v468 = vld [vmem:[#allocation11 + $0x48] sm:$0xff]
    %v469 = vld [vmem:[#allocation11 + $0x50] sm:$0xff]
    %v470 = vld [vmem:[#allocation11 + $0x58] sm:$0xff]
    %v471 = vld [vmem:[#allocation11 + $0x60] sm:$0xff]
    %v472 = vld [vmem:[#allocation11 + $0x68] sm:$0xff]
    %v473 = vld [vmem:[#allocation11 + $0x70] sm:$0xff]
    %v474 = vld [vmem:[#allocation11 + $0x78] sm:$0xff]
    %v475 = vld [vmem:[%s12] sm:$0x1]
    %v476 = vld [vmem:[%s13] sm:$0x1]
    %v477 = vld [vmem:[%s14] sm:$0x1]
    %v479 = vlaneseq
    %v480 = vshrl.u32 %v479, 7
    %v481 = vsub.s32 0, %v480
    %v482 = vrot.slane %v458, %v481
    %484 = vmatprep.subr.mxu0 0.0
    %485 = vmatpush1.msra.mxu0 %v442
    %486 = vmatprep.subr.mxu0 0.0
    %487 = vmatpush1.msra.mxu0 %v443
    %488 = vmatprep.subr.mxu0 0.0
    %489 = vmatpush1.msra.mxu0 %v444
    %490 = vmatprep.subr.mxu0 0.0
    %491 = vmatpush1.msra.mxu0 %v445
    %492 = vmatprep.subr.mxu0 0.0
    %493 = vmatpush1.msra.mxu0 %v446
    %494 = vmatprep.subr.mxu0 0.0
    %495 = vmatpush1.msra.mxu0 %v447
    %496 = vmatprep.subr.mxu0 0.0
    %497 = vmatpush1.msra.mxu0 %v448
    %498 = vmatprep.subr.mxu0 0.0
    %499 = vmatpush1.msra.mxu0 %v449
    %500 = vmatprep.subr.mxu0 0.0
    %501 = vmatpush1.msra.mxu0 %v450
    %502 = vmatprep.subr.mxu0 0.0
    %503 = vmatpush1.msra.mxu0 %v451
    %504 = vmatprep.subr.mxu0 0.0
    %505 = vmatpush1.msra.mxu0 %v452
    %506 = vmatprep.subr.mxu0 0.0
    %507 = vmatpush1.msra.mxu0 %v453
    %508 = vmatprep.subr.mxu0 0.0
    %509 = vmatpush1.msra.mxu0 %v454
    %510 = vmatprep.subr.mxu0 0.0
    %511 = vmatpush1.msra.mxu0 %v455
    %512 = vmatprep.subr.mxu0 0.0
    %513 = vmatpush1.msra.mxu0 %v456
    %514 = vmatprep.subr.mxu0 0.0
    %515 = vmatpush1.msra.mxu0 %v457
    %516 = vmatprep.subr.mxu0 0.0
    %517 = vmatpush1.msra.mxu0 0.0
    %518 = vmatprep.subr.mxu0 0.0
    %519 = vmatpush1.msra.mxu0 0.0
    %520 = vmatprep.subr.mxu0 0.0
    %521 = vmatpush1.msra.mxu0 0.0
    %522 = vmatprep.subr.mxu0 0.0
    %523 = vmatpush1.msra.mxu0 0.0
    %524 = vmatprep.subr.mxu0 0.0
    %525 = vmatpush1.msra.mxu0 0.0
    %526 = vmatprep.subr.mxu0 0.0
    %527 = vmatpush1.msra.mxu0 0.0
    %528 = vmatprep.subr.mxu0 0.0
    %529 = vmatpush1.msra.mxu0 0.0
    %530 = vmatprep.subr.mxu0 0.0
    %531 = vmatpush1.msra.mxu0 0.0
    %532 = vmatprep.subr.mxu0 0.0
    %533 = vmatpush1.msra.mxu0 0.0
    %534 = vmatprep.subr.mxu0 0.0
    %535 = vmatpush1.msra.mxu0 0.0
    %536 = vmatprep.subr.mxu0 0.0
    %537 = vmatpush1.msra.mxu0 0.0
    %538 = vmatprep.subr.mxu0 0.0
    %539 = vmatpush1.msra.mxu0 0.0
    %540 = vmatprep.subr.mxu0 0.0
    %541 = vmatpush1.msra.mxu0 0.0
    %542 = vmatprep.subr.mxu0 0.0
    %543 = vmatpush1.msra.mxu0 0.0
    %544 = vmatprep.subr.mxu0 0.0
    %545 = vmatpush1.msra.mxu0 0.0
    %546 = vmatprep.subr.mxu0 0.0
    %547 = vmatpush1.msra.mxu0 0.0
    %548 = vmatprep.mubr.f32.mxu0 0.0
    %549 = vmatmul.mubr.f32.gmra.mrb[0].mxu0 %v441
    %v550 = vpop.f32.mrb[0].mxu0
    %v551 = vadd.f32 %v482, %v550
    %v552 = vpop.f32.mrb[0].mxu0
    %553 = vdwg.mxu0
    %v554 = vmax.f32 %v551, 0.0
    %v556 = vlaneseq
    %v557 = vshrl.u32 %v556, 7
    %v558 = vsub.s32 0, %v557
    %v559 = vrot.slane %v475, %v558
    %561 = vmatprep.subr.mxu0 0.0
    %562 = vmatpush1.msra.mxu0 %v459
    %563 = vmatprep.subr.mxu0 0.0
    %564 = vmatpush1.msra.mxu0 %v460
    %565 = vmatprep.subr.mxu0 0.0
    %566 = vmatpush1.msra.mxu0 %v461
    %567 = vmatprep.subr.mxu0 0.0
    %568 = vmatpush1.msra.mxu0 %v462
    %569 = vmatprep.subr.mxu0 0.0
    %570 = vmatpush1.msra.mxu0 %v463
    %571 = vmatprep.subr.mxu0 0.0
    %572 = vmatpush1.msra.mxu0 %v464
    %573 = vmatprep.subr.mxu0 0.0
    %574 = vmatpush1.msra.mxu0 %v465
    %575 = vmatprep.subr.mxu0 0.0
    %576 = vmatpush1.msra.mxu0 %v466
    %577 = vmatprep.subr.mxu0 0.0
    %578 = vmatpush1.msra.mxu0 %v467
    %579 = vmatprep.subr.mxu0 0.0
    %580 = vmatpush1.msra.mxu0 %v468
    %581 = vmatprep.subr.mxu0 0.0
    %582 = vmatpush1.msra.mxu0 %v469
    %583 = vmatprep.subr.mxu0 0.0
    %584 = vmatpush1.msra.mxu0 %v470
    %585 = vmatprep.subr.mxu0 0.0
    %586 = vmatpush1.msra.mxu0 %v471
    %587 = vmatprep.subr.mxu0 0.0
    %588 = vmatpush1.msra.mxu0 %v472
    %589 = vmatprep.subr.mxu0 0.0
    %590 = vmatpush1.msra.mxu0 %v473
    %591 = vmatprep.subr.mxu0 0.0
    %592 = vmatpush1.msra.mxu0 %v474
    %593 = vmatprep.subr.mxu0 0.0
    %594 = vmatpush1.msra.mxu0 0.0
    %595 = vmatprep.subr.mxu0 0.0
    %596 = vmatpush1.msra.mxu0 0.0
    %597 = vmatprep.subr.mxu0 0.0
    %598 = vmatpush1.msra.mxu0 0.0
    %599 = vmatprep.subr.mxu0 0.0
    %600 = vmatpush1.msra.mxu0 0.0
    %601 = vmatprep.subr.mxu0 0.0
    %602 = vmatpush1.msra.mxu0 0.0
    %603 = vmatprep.subr.mxu0 0.0
    %604 = vmatpush1.msra.mxu0 0.0
    %605 = vmatprep.subr.mxu0 0.0
    %606 = vmatpush1.msra.mxu0 0.0
    %607 = vmatprep.subr.mxu0 0.0
    %608 = vmatpush1.msra.mxu0 0.0
    %609 = vmatprep.subr.mxu0 0.0
    %610 = vmatpush1.msra.mxu0 0.0
    %611 = vmatprep.subr.mxu0 0.0
    %612 = vmatpush1.msra.mxu0 0.0
    %613 = vmatprep.subr.mxu0 0.0
    %614 = vmatpush1.msra.mxu0 0.0
    %615 = vmatprep.subr.mxu0 0.0
    %616 = vmatpush1.msra.mxu0 0.0
    %617 = vmatprep.subr.mxu0 0.0
    %618 = vmatpush1.msra.mxu0 0.0
    %619 = vmatprep.subr.mxu0 0.0
    %620 = vmatpush1.msra.mxu0 0.0
    %621 = vmatprep.subr.mxu0 0.0
    %622 = vmatpush1.msra.mxu0 0.0
    %623 = vmatprep.subr.mxu0 0.0
    %624 = vmatpush1.msra.mxu0 0.0
    %625 = vmatprep.mubr.f32.mxu0 0.0
    %626 = vmatmul.mubr.f32.gmra.mrb[0].mxu0 %v554
    %v627 = vpop.f32.mrb[0].mxu0
    %v628 = vadd.f32 %v559, %v627
    %v629 = vpop.f32.mrb[0].mxu0
    %630 = vdwg.mxu0
    %v631 = vadd.f32 %v628, %v441
    %632 = vadd.xlane.f32.xlu0 %v631
    %v633 = vpop.xlane.xlu0 %632
    %v634 = vmul.f32 %v631, %v631
    %635 = vadd.xlane.f32.xlu0 %v634
    %v636 = vpop.xlane.xlu0 %635
    %v637 = vmul.f32 %v633, 0.03125
    %v638 = vmul.f32 %v636, 0.03125
    %v639 = vmul.f32 %v637, %v637
    %v640 = vsub.f32 %v638, %v639
    %v641 = vsub.f32 %v631, %v637
    %v642 = vadd.f32 %v640, 1e-05
    %v643 = vrsqrt.pop %v642
    %v644 = vmul.f32 %v641, %v643
    %v646 = vlaneseq
    %v647 = vshrl.u32 %v646, 7
    %v648 = vsub.s32 0, %v647
    %v649 = vrot.slane %v476, %v648
    %v651 = vmul.f32 %v644, %v649
    %v653 = vlaneseq
    %v654 = vshrl.u32 %v653, 7
    %v655 = vsub.s32 0, %v654
    %v656 = vrot.slane %v477, %v655
    %v658 = vadd.f32 %v651, %v656
    %659 = vst [vmem:[#allocation13] sm:$0xff] %v658
    // Predicated region
    $region86: #{tpu_custom_call.1} parent=1 // pred_check
      _
    $region87: #{tpu_custom_call.1} parent=1 // pred_check_branch
      %661 = sbr.rel (0) target = $region89
    $region88: #{tpu_custom_call.1} parent=1 // pred_region
      %s663 = ssub.s32 128, 128
      %664 = vsyncadd [#allocation4], %s663
      %s666 = sshll.u32 [#allocation13], 4
      %s667 = int_to_ptr.vmem [resolvable:$true] %s666
      %669 = dma.vmem_to_hbm [thread:$0]  %s667, 128, %s15, [#allocation4]
    $region89: #{tpu_custom_call.1} parent=1 // pred_fallthru
      _
    // Predicated region
    $region90: #{tpu_custom_call.1} parent=1 // pred_check
      _
    $region91: #{tpu_custom_call.1} parent=1 // pred_check_branch
      %671 = sbr.rel (0) target = $region93
    $region92: #{tpu_custom_call.1} parent=1 // pred_region
      %672 = dma.done [#allocation4], 128
    $region93: #{tpu_custom_call.1} parent=1 // pred_fallthru
      _
    %673 = vsyncpa [#allocation3], 1
    %674 = vsyncpa [#allocation6], 1
    %675 = vsyncpa [#allocation9], 1
    %676 = vsyncpa [#allocation12], 1
    %677 = vsyncpa [#allocation4], 1

</llo_original>
